<compile_context>
chip_gen: v5e
topology: v5e:2x2
jax: 0.10.0
libtpu: 0.0.40
codegen_flags: <defaults>
</compile_context>

<pallas_src>
import functools

import jax
import jax.numpy as jnp
from jax import lax
from jax.experimental import pallas as pl
from jax.experimental.pallas import tpu as pltpu

LANES = 128
SUBLANES = 8
MAX_TILE_ROWS = 4096  # (4096, 128) f32 = 2 MiB per input per pipeline buffer


def _dice_sums_kernel(p_ref, t_ref, out_ref, *, full_chunks, tail_chunks):
    """Accumulates [sum(p*t), sum(p+t)] over row tiles into out_ref.

    out_ref: (2, 8, 128) f32, resident across the whole (reduction) grid.
    full_chunks / tail_chunks are static Python ints (8-row chunks per tile).
    """
    i = pl.program_id(0)
    last = pl.num_programs(0) - 1

    @pl.when(i == 0)
    def _init():
        out_ref[...] = jnp.zeros_like(out_ref)

    def accumulate(n_chunks):
        # Single fused pass: two (8,128) vreg accumulators, per-chunk loads
        # straight from the VMEM block (no whole-tile f32 temporaries).
        def body(k, carry):
            acc_pt, acc_ps = carry
            r = pl.multiple_of(k * SUBLANES, SUBLANES)
            p = p_ref[pl.ds(r, SUBLANES), :].astype(jnp.float32)
            t = t_ref[pl.ds(r, SUBLANES), :].astype(jnp.float32)
            return acc_pt + p * t, acc_ps + (p + t)

        z = jnp.zeros((SUBLANES, LANES), jnp.float32)
        unroll = min(8, n_chunks)
        acc_pt, acc_ps = lax.fori_loop(0, n_chunks, body, (z, z),
                                       unroll=unroll)
        out_ref[0] += acc_pt
        out_ref[1] += acc_ps

    if tail_chunks == full_chunks:
        # All tiles are full -- no branching, no masking.
        accumulate(full_chunks)
    else:
        # Only the last tile is short; both chunk counts are static, so
        # neither branch needs an iota/where mask.
        @pl.when(i < last)
        def _full():
            accumulate(full_chunks)

        @pl.when(i == last)
        def _tail():
            accumulate(tail_chunks)


def _finish(inter, psum, smooth):
    return 1.0 - (2.0 * inter + smooth) / (psum + smooth)


def dice_loss(pred: jax.Array, target: jax.Array, smooth: float = 1.0,
              *, min_kernel_elements: int = 1 << 20,
              max_tile_rows: int = MAX_TILE_ROWS) -> jax.Array:
    """loss = 1 - (2*sum(p*t) + smooth) / (sum(p) + sum(t) + smooth)."""
    assert pred.shape == target.shape
    assert max_tile_rows % SUBLANES == 0
    n = pred.size

    if n == 0:
        return jnp.float32(0.0)  # dice = smooth/smooth = 1

    p_flat = pred.reshape(-1)  # native dtype; free reshape (contiguous)
    t_flat = target.reshape(-1)

    # Small inputs: fixed pallas_call/grid overhead dominates -- use XLA.
    if n < min_kernel_elements:
        p = p_flat.astype(jnp.float32)
        t = t_flat.astype(jnp.float32)
        return _finish(jnp.sum(p * t), jnp.sum(p) + jnp.sum(t), smooth)

    chunk = SUBLANES * LANES                 # 1024 elements
    n_main = (n // chunk) * chunk            # 1024-aligned prefix

    # <1024-element tail: tiny plain-jnp reduction instead of padding copies.
    tail_inter = jnp.float32(0.0)
    tail_psum = jnp.float32(0.0)
    if n_main < n:
        p_tail = p_flat[n_main:].astype(jnp.float32)
        t_tail = t_flat[n_main:].astype(jnp.float32)
        tail_inter = jnp.sum(p_tail * t_tail)
        tail_psum = jnp.sum(p_tail + t_tail)

    if n_main == 0:
        return _finish(tail_inter, tail_psum, smooth)

    rows = n_main // LANES                   # multiple of 8
    p2 = p_flat[:n_main].reshape(rows, LANES)
    t2 = t_flat[:n_main].reshape(rows, LANES)

    tile_rows = min(max_tile_rows, rows)     # multiple of 8, <= rows
    num_tiles = pl.cdiv(rows, tile_rows)
    full_chunks = tile_rows // SUBLANES
    rem = rows % tile_rows                   # multiple of 8 (possibly 0)
    tail_chunks = full_chunks if rem == 0 else rem // SUBLANES

    kernel = functools.partial(
        _dice_sums_kernel,
        full_chunks=full_chunks,
        tail_chunks=tail_chunks,
    )

    partials = pl.pallas_call(
        kernel,
        out_shape=jax.ShapeDtypeStruct((2, SUBLANES, LANES), jnp.float32),
        grid_spec=pltpu.PrefetchScalarGridSpec(
            num_scalar_prefetch=0,
            grid=(num_tiles,),
            in_specs=[
                pl.BlockSpec((tile_rows, LANES), lambda i: (i, 0)),
                pl.BlockSpec((tile_rows, LANES), lambda i: (i, 0)),
            ],
            out_specs=pl.BlockSpec((2, SUBLANES, LANES),
                                   lambda i: (0, 0, 0)),
        ),
        compiler_params=pltpu.CompilerParams(
            dimension_semantics=("arbitrary",),
            vmem_limit_bytes=32 << 20,
        ),
    )(p2, t2)

    # Tiny final combine (2048 floats) in plain JAX.
    inter = jnp.sum(partials[0]) + tail_inter
    psum = jnp.sum(partials[1]) + tail_psum
    return _finish(inter, psum, smooth)


def dice_loss_ref(pred, target, smooth: float = 1.0):
    p = pred.astype(jnp.float32).reshape(-1)
    t = target.astype(jnp.float32).reshape(-1)
    inter = jnp.sum(p * t)
    return 1.0 - (2.0 * inter + smooth) / (jnp.sum(p) + jnp.sum(t) + smooth)


if __name__ == "__main__":
    key = jax.random.PRNGKey(0)
    k1, k2, k3, k4, k5, k6 = jax.random.split(key, 6)

    # Case 1: standard NCHW shape; force the Pallas kernel path.
    pred1 = jax.nn.sigmoid(jax.random.normal(k1, (2, 4, 16, 16), jnp.float32))
    targ1 = (jax.random.uniform(k2, (2, 4, 16, 16)) > 0.5).astype(jnp.float32)
    out1 = jax.block_until_ready(dice_loss(pred1, targ1,
                                           min_kernel_elements=0))
    ref1 = dice_loss_ref(pred1, targ1)
    assert jnp.allclose(out1, ref1, rtol=1e-5, atol=1e-6), (out1, ref1)

    # Case 2: element count not a multiple of 1024 -> aligned-prefix kernel
    # plus plain-jnp tail (no padding copies).
    pred2 = jax.nn.sigmoid(jax.random.normal(k3, (2, 4, 17, 19), jnp.float32))
    targ2 = (jax.random.uniform(k4, (2, 4, 17, 19)) > 0.5).astype(jnp.float32)
    out2 = jax.block_until_ready(dice_loss(pred2, targ2,
                                           min_kernel_elements=0))
    ref2 = dice_loss_ref(pred2, targ2)
    assert jnp.allclose(out2, ref2, rtol=1e-5, atol=1e-6), (out2, ref2)

    # Case 3: multi-tile grid with a shorter last tile (exercises the
    # static full/tail branch split; small max_tile_rows just for the test).
    pred3 = jax.nn.sigmoid(jax.random.normal(k5, (3, 4, 16, 16), jnp.float32))
    targ3 = (jax.random.uniform(k6, (3, 4, 16, 16)) > 0.5).astype(jnp.float32)
    out3 = jax.block_until_ready(dice_loss(pred3, targ3,
                                           min_kernel_elements=0,
                                           max_tile_rows=16))
    ref3 = dice_loss_ref(pred3, targ3)
    assert jnp.allclose(out3, ref3, rtol=1e-5, atol=1e-6), (out3, ref3)

    # Case 4: default small-input fast path (plain JAX) matches the kernel.
    out4 = jax.block_until_ready(dice_loss(pred1, targ1))
    assert jnp.allclose(out4, out1, rtol=1e-5, atol=1e-6), (out4, out1)

    print("KERNEL_OK")
</pallas_src>

<mosaic_0001>
module attributes {stable_mosaic.version = 11 : i64} {
  func.func @_dice_sums_kernel(%arg0: i32, %arg1: memref<16x128xf32, #tpu.memory_space<vmem>>, %arg2: memref<16x128xf32, #tpu.memory_space<vmem>>, %arg3: memref<2x8x128xf32, #tpu.memory_space<vmem>>) attributes {dimension_semantics = [#tpu.dimension_semantics<arbitrary>], iteration_bounds = array<i64: 1>, scalar_prefetch = 0 : i64, scratch_operands = 0 : i64, tpu.core_type = #tpu.core_type<tc>, window_params = [{transform_indices = @transform_0, window_bounds = array<i64: 16, 128>}, {transform_indices = @transform_1, window_bounds = array<i64: 16, 128>}, {pipeline_mode = #tpu.pipeline_mode<synchronous>, transform_indices = @transform_2, window_bounds = array<i64: 2, 8, 128>}]} {
    %c0_i32 = arith.constant 0 : i32
    %0 = arith.cmpi eq, %arg0, %c0_i32 : i32
    %1 = arith.extui %0 : i1 to i32
    %c0_i32_0 = arith.constant 0 : i32
    %2 = arith.cmpi ne, %1, %c0_i32_0 : i32
    scf.if %2 {
      %cst_17 = arith.constant 0.000000e+00 : f32
      %36 = vector.broadcast %cst_17 : f32 to vector<2x8x128xf32>
      %c0_18 = arith.constant 0 : index
      %c0_19 = arith.constant 0 : index
      %c0_20 = arith.constant 0 : index
      %37 = vector.load %arg3[%c0_18, %c0_19, %c0_20] : memref<2x8x128xf32, #tpu.memory_space<vmem>>, vector<2x8x128xf32>
      tpu.vector_store %arg3[%c0_18, %c0_19, %c0_20], %36 {strides = array<i32>} : memref<2x8x128xf32, #tpu.memory_space<vmem>>, vector<2x8x128xf32>,
    } else {
    }
    %cst = arith.constant 0.000000e+00 : f32
    %3 = vector.broadcast %cst : f32 to vector<8x128xf32>
    %c0_i32_1 = arith.constant 0 : i32
    %c8_i32 = arith.constant 8 : i32
    %4 = arith.muli %c0_i32_1, %c8_i32 : i32
    %5 = tpu.assume_multiple %4, 8 : i32
    %6 = arith.index_cast %5 : i32 to index
    %c0 = arith.constant 0 : index
    %7 = vector.load %arg1[%6, %c0] : memref<16x128xf32, #tpu.memory_space<vmem>>, vector<8x128xf32>
    %8 = arith.index_cast %5 : i32 to index
    %c0_2 = arith.constant 0 : index
    %9 = vector.load %arg2[%8, %c0_2] : memref<16x128xf32, #tpu.memory_space<vmem>>, vector<8x128xf32>
    %10 = arith.mulf %7, %9 : vector<8x128xf32>
    %11 = arith.addf %3, %10 : vector<8x128xf32>
    %12 = arith.addf %7, %9 : vector<8x128xf32>
    %13 = arith.addf %3, %12 : vector<8x128xf32>
    %c1_i32 = arith.constant 1 : i32
    %c8_i32_3 = arith.constant 8 : i32
    %14 = arith.muli %c1_i32, %c8_i32_3 : i32
    %15 = tpu.assume_multiple %14, 8 : i32
    %16 = arith.index_cast %15 : i32 to index
    %c0_4 = arith.constant 0 : index
    %17 = vector.load %arg1[%16, %c0_4] : memref<16x128xf32, #tpu.memory_space<vmem>>, vector<8x128xf32>
    %18 = arith.index_cast %15 : i32 to index
    %c0_5 = arith.constant 0 : index
    %19 = vector.load %arg2[%18, %c0_5] : memref<16x128xf32, #tpu.memory_space<vmem>>, vector<8x128xf32>
    %20 = arith.mulf %17, %19 : vector<8x128xf32>
    %21 = arith.addf %11, %20 : vector<8x128xf32>
    %22 = arith.addf %17, %19 : vector<8x128xf32>
    %23 = arith.addf %13, %22 : vector<8x128xf32>
    %c2_i32 = arith.constant 2 : i32
    %c0_6 = arith.constant 0 : index
    %c0_7 = arith.constant 0 : index
    %c0_8 = arith.constant 0 : index
    %24 = vector.load %arg3[%c0_6, %c0_7, %c0_8] : memref<2x8x128xf32, #tpu.memory_space<vmem>>, vector<1x8x128xf32>
    %25 = vector.shape_cast %24 : vector<1x8x128xf32> to vector<8x128xf32>
    %26 = arith.addf %25, %21 : vector<8x128xf32>
    %c0_9 = arith.constant 0 : index
    %c0_10 = arith.constant 0 : index
    %c0_11 = arith.constant 0 : index
    %27 = vector.load %arg3[%c0_9, %c0_10, %c0_11] : memref<2x8x128xf32, #tpu.memory_space<vmem>>, vector<1x8x128xf32>
    %28 = vector.shape_cast %27 : vector<1x8x128xf32> to vector<8x128xf32>
    %29 = vector.shape_cast %26 : vector<8x128xf32> to vector<1x8x128xf32>
    tpu.vector_store %arg3[%c0_9, %c0_10, %c0_11], %29 {strides = array<i32>} : memref<2x8x128xf32, #tpu.memory_space<vmem>>, vector<1x8x128xf32>,
    %c1 = arith.constant 1 : index
    %c0_12 = arith.constant 0 : index
    %c0_13 = arith.constant 0 : index
    %30 = vector.load %arg3[%c1, %c0_12, %c0_13] : memref<2x8x128xf32, #tpu.memory_space<vmem>>, vector<1x8x128xf32>
    %31 = vector.shape_cast %30 : vector<1x8x128xf32> to vector<8x128xf32>
    %32 = arith.addf %31, %23 : vector<8x128xf32>
    %c1_14 = arith.constant 1 : index
    %c0_15 = arith.constant 0 : index
    %c0_16 = arith.constant 0 : index
    %33 = vector.load %arg3[%c1_14, %c0_15, %c0_16] : memref<2x8x128xf32, #tpu.memory_space<vmem>>, vector<1x8x128xf32>
    %34 = vector.shape_cast %33 : vector<1x8x128xf32> to vector<8x128xf32>
    %35 = vector.shape_cast %32 : vector<8x128xf32> to vector<1x8x128xf32>
    tpu.vector_store %arg3[%c1_14, %c0_15, %c0_16], %35 {strides = array<i32>} : memref<2x8x128xf32, #tpu.memory_space<vmem>>, vector<1x8x128xf32>,
    return
  }
  func.func @transform_0(%arg0: i32) -> (i32, i32) {
    %c0_i32 = arith.constant 0 : i32
    %c0_i32_0 = arith.constant 0 : i32
    return %arg0, %c0_i32 : i32, i32
  }
  func.func @transform_1(%arg0: i32) -> (i32, i32) {
    %c0_i32 = arith.constant 0 : i32
    %c0_i32_0 = arith.constant 0 : i32
    return %arg0, %c0_i32 : i32, i32
  }
  func.func @transform_2(%arg0: i32) -> (i32, i32, i32) {
    %c0_i32 = arith.constant 0 : i32
    %c0_i32_0 = arith.constant 0 : i32
    %c0_i32_1 = arith.constant 0 : i32
    %c0_i32_2 = arith.constant 0 : i32
    return %c0_i32, %c0_i32_0, %c0_i32_1 : i32, i32, i32
  }
}

</mosaic_0001>

<llo_original>
// kernel: tpu_custom_call.1
$region0: #{tpu_custom_call.1}
  #allocation0 [shape = 'u32[]', space=smem, size = 0x4, offset = 0x4, fixed_abs, tag = 'smem constant byte address 0x4 - core index']
  #allocation1 [shape = 'u32[72,128]{1,0:T(1,128)}', space=vmem, size = 0x9000, scoped, tag = 'internal scratch']
  %s0 = inlined_call_operand.hbm [shape: f32[16,128], index: 0, kind: input, shape index: {}]
  %s1 = inlined_call_operand.hbm [shape: f32[16,128], index: 1, kind: input, shape index: {}]
  %s2 = inlined_call_operand.hbm [shape: f32[2,8,128], index: 2, kind: output, shape index: {}]
  %s3 = sld [smem:[#allocation0]]
  $region30: #{tpu_custom_call.1} parent=0
    _
  %s5 = ssub.s32 1, %s3
  %s6 = scalar_select 0, %s5, %s3
  $region1: #{tpu_custom_call.1} parent=0
    #allocation2 [shape = 'u8[8192]{0}', space=vmem, size = 0x2000, scoped, tag = 'input window, operand 0, single buffered']
    #allocation3 [shape = 's32[1]{0}', space=sflag, size = 0x4, scoped, tag = 'scoped memory for tpu_custom_call.1']
    #allocation4 [shape = 's32[1]{0}', space=sflag, size = 0x4, scoped, tag = 'scoped memory for tpu_custom_call.1']
    #allocation5 [shape = 'u8[8192]{0}', space=vmem, size = 0x2000, scoped, tag = 'input window, operand 1, single buffered']
    #allocation6 [shape = 's32[1]{0}', space=sflag, size = 0x4, scoped, tag = 'scoped memory for tpu_custom_call.1']
    #allocation7 [shape = 'u8[8192]{0}', space=vmem, size = 0x2000, scoped, tag = 'output window, operand 0, single buffered']
    %7 = vsyncpa [#allocation3], 0
    %8 = vsyncpa [#allocation6], 0
    %9 = vsyncpa [#allocation4], 0
    // Predicated region
    $region2: #{tpu_custom_call.1} parent=1 // pred_check
      _
    $region3: #{tpu_custom_call.1} parent=1 // pred_check_branch
      %11 = sbr.rel (0) target = $region5
    $region4: #{tpu_custom_call.1} parent=1 // pred_region
      %13 = vsyncadd [#allocation3], 0
      %s14 = sshll.u32 %s0, 4
      %s15 = int_to_ptr.hbm [resolvable:$true] %s14
      %s16 = sshll.u32 [#allocation2], 4
      %s17 = int_to_ptr.vmem [resolvable:$true] %s16
      %22 = dma.hbm_to_vmem [thread:$0]  %s15, 256, %s17, [#allocation3], 128, 128, 8
    $region5: #{tpu_custom_call.1} parent=1 // pred_fallthru
      _
    // Predicated region
    $region6: #{tpu_custom_call.1} parent=1 // pred_check
      _
    $region7: #{tpu_custom_call.1} parent=1 // pred_check_branch
      %24 = sbr.rel (0) target = $region9
    $region8: #{tpu_custom_call.1} parent=1 // pred_region
      %26 = vsyncadd [#allocation6], 0
      %s27 = sshll.u32 %s1, 4
      %s28 = int_to_ptr.hbm [resolvable:$true] %s27
      %s29 = sshll.u32 [#allocation5], 4
      %s30 = int_to_ptr.vmem [resolvable:$true] %s29
      %35 = dma.hbm_to_vmem [thread:$0]  %s28, 256, %s30, [#allocation6], 128, 128, 8
    $region9: #{tpu_custom_call.1} parent=1 // pred_fallthru
      _
    // Predicated region
    $region10: #{tpu_custom_call.1} parent=1 // pred_check
      _
    $region11: #{tpu_custom_call.1} parent=1 // pred_check_branch
      %37 = sbr.rel (0) target = $region13
    $region12: #{tpu_custom_call.1} parent=1 // pred_region
      %39 = dma.done [#allocation3], 256
    $region13: #{tpu_custom_call.1} parent=1 // pred_fallthru
      _
    // Predicated region
    $region14: #{tpu_custom_call.1} parent=1 // pred_check
      _
    $region15: #{tpu_custom_call.1} parent=1 // pred_check_branch
      %41 = sbr.rel (0) target = $region17
    $region16: #{tpu_custom_call.1} parent=1 // pred_region
      %43 = dma.done [#allocation6], 256
    $region17: #{tpu_custom_call.1} parent=1 // pred_fallthru
      _
    %p44 = scmp.eq.s32.totalorder 0, 0
    // Predicated region
    $region18: #{tpu_custom_call.1} parent=1 // pred_check
      %p45 = pneg %p44
    $region19: #{tpu_custom_call.1} parent=1 // pred_check_branch
      %47 = sbr.rel (%p45) target = $region21
    $region20: #{tpu_custom_call.1} parent=1 // pred_region
      %48 = vst [vmem:[#allocation7] sm:$0xff] 0.0
      %49 = vst [vmem:[#allocation7 + $0x8] sm:$0xff] 0.0
    $region21: #{tpu_custom_call.1} parent=1 // pred_fallthru
      _
    %v50 = vld [vmem:[#allocation2] sm:$0xff]
    %v51 = vld [vmem:[#allocation5] sm:$0xff]
    %v52 = vmul.f32 %v50, %v51
    %v53 = vadd.f32 %v52, 0.0
    %v54 = vadd.f32 %v50, %v51
    %v55 = vadd.f32 %v54, 0.0
    %s56 = scalar_lea.vmem [#allocation2], 8
    %v57 = vld [vmem:[%s56] sm:$0xff]
    %s58 = scalar_lea.vmem [#allocation5], 8
    %v59 = vld [vmem:[%s58] sm:$0xff]
    %v60 = vmul.f32 %v57, %v59
    %v61 = vadd.f32 %v53, %v60
    %v62 = vadd.f32 %v57, %v59
    %v63 = vadd.f32 %v55, %v62
    %v64 = vld [vmem:[#allocation7] sm:$0xff]
    %v65 = vadd.f32 %v64, %v61
    %66 = vst [vmem:[#allocation7] sm:$0xff] %v65
    %s67 = scalar_lea.vmem [#allocation7], 8
    %v68 = vld [vmem:[%s67] sm:$0xff]
    %v69 = vadd.f32 %v68, %v63
    %70 = vst [vmem:[%s67] sm:$0xff] %v69
    // Predicated region
    $region22: #{tpu_custom_call.1} parent=1 // pred_check
      _
    $region23: #{tpu_custom_call.1} parent=1 // pred_check_branch
      %72 = sbr.rel (0) target = $region25
    $region24: #{tpu_custom_call.1} parent=1 // pred_region
      %74 = vsyncadd [#allocation4], 0
      %s75 = sshll.u32 [#allocation7], 4
      %s76 = int_to_ptr.vmem [resolvable:$true] %s75
      %s77 = sshll.u32 %s2, 4
      %s78 = int_to_ptr.hbm [resolvable:$true] %s77
      %83 = dma.vmem_to_hbm [thread:$0]  %s76, 256, %s78, [#allocation4], 128, 128, 8
    $region25: #{tpu_custom_call.1} parent=1 // pred_fallthru
      _
    // Predicated region
    $region26: #{tpu_custom_call.1} parent=1 // pred_check
      _
    $region27: #{tpu_custom_call.1} parent=1 // pred_check_branch
      %85 = sbr.rel (0) target = $region29
    $region28: #{tpu_custom_call.1} parent=1 // pred_region
      %87 = dma.done [#allocation4], 256
    $region29: #{tpu_custom_call.1} parent=1 // pred_fallthru
      _
    %88 = vsyncpa [#allocation3], 1
    %89 = vsyncpa [#allocation6], 1
    %90 = vsyncpa [#allocation4], 1

</llo_original>
